<compile_context>
chip_gen: v5e
topology: v5e:2x2
jax: 0.10.0
libtpu: 0.0.40
codegen_flags: <defaults>
</compile_context>

<pallas_src>
import functools
import numbers

import jax
import jax.numpy as jnp
import numpy as np
from jax import lax
from jax.experimental import pallas as pl
from jax.experimental.pallas import tpu as pltpu


# ----------------------------- shared color math ----------------------------
# Used by the Pallas kernel, the grayscale-mean pre-pass and the pure-JAX
# reference, so every path evaluates exactly the same formulas.

def _blend(im1, im2, ratio):
    # torchvision _blend (bound=1.0 for float images), 1 mul instead of 2.
    return jnp.clip(im2 + ratio * (im1 - im2), 0.0, 1.0)


def _rgb_to_grayscale(r, g, b):
    return 0.2989 * r + 0.587 * g + 0.114 * b


def _adjust_brightness(r, g, b, bf):
    # blend(x, zeros, bf) == clip(bf*x): drops the zeros broadcast + add.
    return (jnp.clip(bf * r, 0.0, 1.0),
            jnp.clip(bf * g, 0.0, 1.0),
            jnp.clip(bf * b, 0.0, 1.0))


def _adjust_contrast(r, g, b, cf, mean):
    # `mean` is the per-image grayscale mean, supplied externally.
    return _blend(r, mean, cf), _blend(g, mean, cf), _blend(b, mean, cf)


def _adjust_saturation(r, g, b, sf):
    gray = _rgb_to_grayscale(r, g, b)
    return _blend(r, gray, sf), _blend(g, gray, sf), _blend(b, gray, sf)


def _mod1(x):
    # floor-mod by 1.0; every call site guarantees x > 0.
    return x - jnp.floor(x)


def _adjust_hue(r, g, b, hf):
    # ---- rgb -> hsv (torchvision _rgb2hsv semantics) ----
    # The branch masks are >=-comparisons on the raw channels and the same
    # masks define maxc, so branch choice and max value are always consistent.
    is_r = (r >= g) & (r >= b)
    is_g = (~is_r) & (g >= b)
    maxc = jnp.where(is_r, r, jnp.where(is_g, g, b))
    minc = jnp.minimum(jnp.minimum(r, g), b)
    cr = maxc - minc
    eqc = cr == 0.0
    s = cr / jnp.where(eqc, 1.0, maxc)
    inv_cr = 1.0 / jnp.where(eqc, 1.0, cr)          # one divide reused 3x
    rc = (maxc - r) * inv_cr
    gc = (maxc - g) * inv_cr
    bc = (maxc - b) * inv_cr
    hr = jnp.where(is_r, bc - gc, 0.0)
    hg = jnp.where(is_g, 2.0 + rc - bc, 0.0)
    hb = jnp.where((~is_r) & (~is_g), 4.0 + gc - rc, 0.0)
    v = maxc

    # Hue shift folded into a single mod; the argument is strictly positive
    # (>= 1/3 for hf >= -0.5), so jnp.floor never sees a negative value.
    h = _mod1((hr + hg + hb) * (1.0 / 6.0) + (hf + 1.0))

    # ---- hsv -> rgb, branch-free (no floor, no sector selects) ----
    # f(n) = v - v*s*clip(min(k, 4-k), 0, 1),  k = (n + 6h) mod 6.
    h6 = 6.0 * h
    vs = v * s

    def chan(nshift):
        k = nshift + h6                      # in [1, 12); one conditional sub
        k = jnp.where(k >= 6.0, k - 6.0, k)  # exact mod-6 for this range
        a = jnp.clip(jnp.minimum(k, 4.0 - k), 0.0, 1.0)
        return v - vs * a                    # already in [0, 1]

    return chan(5.0), chan(3.0), chan(1.0)


def _apply_chain(r, g, b, factors, mean, fn_order, active):
    """Apply the sampled op sequence.  `factors` is any 4-indexable (tuple of
    scalars in the kernel, jnp array elsewhere); `mean` is the precomputed
    grayscale mean used by adjust_contrast."""
    for fn_id in fn_order:
        if fn_id == 0 and active[0]:
            r, g, b = _adjust_brightness(r, g, b, factors[0])
        elif fn_id == 1 and active[1]:
            r, g, b = _adjust_contrast(r, g, b, factors[1], mean)
        elif fn_id == 2 and active[2]:
            r, g, b = _adjust_saturation(r, g, b, factors[2])
        elif fn_id == 3 and active[3]:
            r, g, b = _adjust_hue(r, g, b, factors[3])
    return r, g, b


# ------------------------------- Pallas kernel ------------------------------

def _color_jitter_kernel(params_ref, img_ref, out_ref, *, fn_order, active,
                         strip):
    """params (SMEM, shape (8*N,)): per image [bf, cf, sf, hf, mean, 0, 0, 0].
    img/out blocks: (3, TR, 128) lane-dense channel planes of one image."""
    n = pl.program_id(0)
    base = n * 8
    factors = (params_ref[base + 0], params_ref[base + 1],
               params_ref[base + 2], params_ref[base + 3])
    mean = params_ref[base + 4]
    n_strips = img_ref.shape[1] // strip     # static

    def strip_body(si, carry):
        row = pl.multiple_of(si * strip, strip)
        sl = pl.ds(row, strip)
        # Per-strip loads keep the whole chain (incl. hue temporaries) in
        # vregs instead of spilling (TR,128) intermediates to VMEM.
        r = img_ref[0, sl, :].astype(jnp.float32)
        g = img_ref[1, sl, :].astype(jnp.float32)
        b = img_ref[2, sl, :].astype(jnp.float32)
        r, g, b = _apply_chain(r, g, b, factors, mean, fn_order, active)
        out_ref[0, sl, :] = r.astype(out_ref.dtype)
        out_ref[1, sl, :] = g.astype(out_ref.dtype)
        out_ref[2, sl, :] = b.astype(out_ref.dtype)
        return carry

    if n_strips == 1:
        strip_body(0, 0)
    else:
        lax.fori_loop(0, n_strips, strip_body, 0, unroll=2)


# --------------------------------- wrapper -----------------------------------

def _round_up(x, m):
    return ((x + m - 1) // m) * m


def _sublane_multiple(dtype):
    # dtype-aware packed-tile rounding: f32 -> 8, bf16 -> 16, int8/fp8 -> 32.
    return {4: 8, 2: 16, 1: 32}.get(jnp.dtype(dtype).itemsize, 8)


def _tile_rows(P, N, dtype, max_rows, min_steps):
    sub = _sublane_multiple(dtype)
    R = pl.cdiv(P, 128)
    R8 = _round_up(R, sub)
    tr = min(R8, _round_up(max_rows, sub))
    # v7x: keep at least `min_steps` grid steps so both TensorCores (and the
    # BlockSpec pipeline) get work even for a single small image.
    while N * pl.cdiv(R8, tr) < min_steps and tr > sub:
        tr = _round_up(pl.cdiv(tr, 2), sub)
    n_tiles = pl.cdiv(R8, tr)
    return tr, n_tiles


@functools.partial(jax.jit,
                   static_argnames=("fn_order", "active", "max_rows",
                                    "min_steps"))
def color_jitter_pallas(img, factors, fn_order, active, max_rows=1024,
                        min_steps=4):
    """img: (N, 3, H, W) float in [0,1]; factors: (4,) f32 [bf, cf, sf, hf].
    Returns (jittered image, per-image contrast grayscale means)."""
    N, C, H, W = img.shape
    assert C == 3, "color jitter expects RGB (C == 3)"
    assert jnp.issubdtype(img.dtype, jnp.floating)

    P = H * W
    tr, n_tiles = _tile_rows(P, N, img.dtype, max_rows, min_steps)
    R_pad = tr * n_tiles
    P_pad = R_pad * 128

    # Lane-dense layout: (N*3, R_pad, 128); pad only when H*W is misaligned.
    flat = img.reshape(N * C, P)
    if P_pad > P:
        # TODO(synk): a masked last-tile store would avoid this pad + the
        # trailing slice copy for ragged H*W; kept simple for correctness.
        flat = jnp.pad(flat, ((0, 0), (0, P_pad - P)))
    x = flat.reshape(N * C, R_pad, 128)

    # Per-image grayscale mean for adjust_contrast, computed on the SAME
    # lane-dense buffer (padding zeros map to zero through the prefix ops, so
    # sum / true_pixel_count is exact).
    if active[1] and 1 in fn_order:
        planes = x.reshape(N, C, R_pad, 128).astype(jnp.float32)
        pr, pg, pb = planes[:, 0], planes[:, 1], planes[:, 2]
        prefix = fn_order[:fn_order.index(1)]
        pr, pg, pb = _apply_chain(pr, pg, pb, factors, 0.0, prefix, active)
        gray = _rgb_to_grayscale(pr, pg, pb)
        means = jnp.sum(gray, axis=(-2, -1)) / jnp.float32(P)
    else:
        means = jnp.zeros((N,), jnp.float32)

    params = jnp.concatenate(
        [jnp.broadcast_to(factors.astype(jnp.float32), (N, 4)),
         means[:, None],
         jnp.zeros((N, 3), jnp.float32)], axis=1).reshape(-1)

    strip = 16 if (tr % 16 == 0) else _sublane_multiple(img.dtype)
    kernel = functools.partial(_color_jitter_kernel, fn_order=fn_order,
                               active=active, strip=strip)
    block_bytes = 3 * tr * 128 * img.dtype.itemsize

    out = pl.pallas_call(
        kernel,
        out_shape=jax.ShapeDtypeStruct(x.shape, img.dtype),
        grid_spec=pl.GridSpec(
            grid=(N, n_tiles),
            in_specs=[
                pl.BlockSpec(memory_space=pltpu.MemorySpace.SMEM),  # params
                pl.BlockSpec((3, tr, 128), lambda n, t: (n, t, 0)),
            ],
            out_specs=pl.BlockSpec((3, tr, 128), lambda n, t: (n, t, 0)),
        ),
        compiler_params=pltpu.CompilerParams(
            dimension_semantics=("parallel", "parallel"),
            # in + out, double-buffered, plus generous Mosaic scratch margin;
            # keeps v5e's 16 MiB default from being the silent limiter.
            vmem_limit_bytes=int(4 * block_bytes + (16 << 20))),
    )(params, x)

    out = out.reshape(N, C, P_pad)
    if P_pad > P:
        out = out[:, :, :P]
    return out.reshape(N, C, H, W), means


# ------------------------------ pure-JAX reference ---------------------------

def color_jitter_reference(img, factors, means, fn_order, active):
    r = img[:, 0].astype(jnp.float32)
    g = img[:, 1].astype(jnp.float32)
    b = img[:, 2].astype(jnp.float32)
    mean = means[:, None, None]
    r, g, b = _apply_chain(r, g, b, factors, mean, fn_order, active)
    return jnp.stack([r, g, b], axis=1).astype(img.dtype)


# --------------------------- module-like wrapper ----------------------------

class RandomColorJitter:
    """JAX/Pallas port of transforms.custom_transforms.RandomColorJitter."""

    def __init__(self, brightness=0, contrast=0, saturation=0, hue=0, p=0.5):
        self.brightness = self._check_input(brightness, "brightness")
        self.contrast = self._check_input(contrast, "contrast")
        self.saturation = self._check_input(saturation, "saturation")
        self.hue = self._check_input(
            hue, "hue", center=0, bound=(-0.5, 0.5), clip_first_on_zero=False)
        self.p = p

    @staticmethod
    def _check_input(value, name, center=1, bound=(0, float("inf")),
                     clip_first_on_zero=True):
        if isinstance(value, numbers.Number):
            if value < 0:
                raise ValueError(
                    f"If {name} is a single number, it must be non negative.")
            value = [center - float(value), center + float(value)]
            if clip_first_on_zero:
                value[0] = max(value[0], 0.0)
        elif isinstance(value, (tuple, list)) and len(value) == 2:
            if not bound[0] <= value[0] <= value[1] <= bound[1]:
                raise ValueError(f"{name} values should be between {bound}")
        else:
            raise TypeError(
                f"{name} should be a single number or a list/tuple with length 2.")
        if value[0] == value[1] == center:
            value = None
        return value

    def __call__(self, img, key, return_params=False):
        kp, kperm, kb, kc, ks, kh = jax.random.split(key, 6)
        # TODO(synk): the host-side p-gate + permutation (device->host sync,
        # up to 24 compiled variants per active-mask) mirrors torch's control
        # flow; a fully device-side version would need scalar-prefetched
        # fn_idx + lax.switch inside the kernel.
        if float(jax.random.uniform(kp)) >= self.p:
            if return_params:
                return (img, (0, 0, 0, 0), jnp.zeros((4,), jnp.float32),
                        jnp.zeros((img.shape[0],), jnp.float32))
            return img

        fn_idx = tuple(int(v) for v in
                       np.asarray(jax.random.permutation(kperm, 4)))
        active = (self.brightness is not None, self.contrast is not None,
                  self.saturation is not None, self.hue is not None)

        def sample(k, rng):
            if rng is None:
                return jnp.float32(0.0)
            return jax.random.uniform(k, (), jnp.float32, rng[0], rng[1])

        factors = jnp.stack([sample(kb, self.brightness),
                             sample(kc, self.contrast),
                             sample(ks, self.saturation),
                             sample(kh, self.hue)])

        out, means = color_jitter_pallas(img, factors, fn_idx, active)
        if return_params:
            return out, fn_idx, factors, means
        return out


# ----------------------------------- main -----------------------------------

if __name__ == "__main__":
    key = jax.random.PRNGKey(0)
    k_img, k_fwd, k_img2, k_fwd2 = jax.random.split(key, 4)

    jitter = RandomColorJitter(brightness=(0.6, 0.9), contrast=(0.6, 0.9),
                               saturation=(0.6, 0.9), hue=(-0.08, 0.08), p=1.0)

    # Test 1: small batch, tiny spatial size (single grid step per image).
    img = 0.02 + 0.96 * jax.random.uniform(k_img, (2, 3, 16, 16), jnp.float32)
    out, fn_idx, factors, means = jitter(img, k_fwd, return_params=True)
    out = jax.block_until_ready(out)
    ref = color_jitter_reference(img, factors, means, fn_idx,
                                 (True, True, True, True))
    np.testing.assert_allclose(np.asarray(out), np.asarray(ref),
                               rtol=2e-4, atol=2e-4)
    assert out.shape == img.shape and out.dtype == img.dtype

    # Test 2: non-aligned H*W exercising the padded tail, multi-tile grid and
    # the in-kernel strip loop.
    img2 = 0.02 + 0.96 * jax.random.uniform(k_img2, (1, 3, 96, 112),
                                            jnp.float32)
    out2, fn_idx2, factors2, means2 = jitter(img2, k_fwd2, return_params=True)
    out2 = jax.block_until_ready(out2)
    ref2 = color_jitter_reference(img2, factors2, means2, fn_idx2,
                                  (True, True, True, True))
    np.testing.assert_allclose(np.asarray(out2), np.asarray(ref2),
                               rtol=2e-4, atol=2e-4)
    assert bool(jnp.all(jnp.isfinite(out2)))
    assert out2.shape == img2.shape and out2.dtype == img2.dtype

    print("KERNEL_OK")
</pallas_src>

<mosaic_0001>
module attributes {stable_mosaic.version = 11 : i64} {
  func.func @_color_jitter_kernel(%arg0: i32, %arg1: i32, %arg2: memref<16xf32, #tpu.memory_space<smem>>, %arg3: memref<3x8x128xf32, #tpu.memory_space<vmem>>, %arg4: memref<3x8x128xf32, #tpu.memory_space<vmem>>) attributes {dimension_semantics = [#tpu.dimension_semantics<parallel>, #tpu.dimension_semantics<parallel>], iteration_bounds = array<i64: 2, 1>, scalar_prefetch = 0 : i64, scratch_operands = 0 : i64, tpu.core_type = #tpu.core_type<tc>, window_params = [{transform_indices = @transform_0, window_bounds = array<i64: 16>}, {transform_indices = @transform_1, window_bounds = array<i64: 3, 8, 128>}, {transform_indices = @transform_2, window_bounds = array<i64: 3, 8, 128>}]} {
    %c8_i32 = arith.constant 8 : i32
    %0 = arith.muli %arg0, %c8_i32 : i32
    %c0_i32 = arith.constant 0 : i32
    %1 = arith.addi %0, %c0_i32 : i32
    %2 = arith.index_cast %1 : i32 to index
    %3 = memref.load %arg2[%2] : memref<16xf32, #tpu.memory_space<smem>>
    %c1_i32 = arith.constant 1 : i32
    %4 = arith.addi %0, %c1_i32 : i32
    %5 = arith.index_cast %4 : i32 to index
    %6 = memref.load %arg2[%5] : memref<16xf32, #tpu.memory_space<smem>>
    %c2_i32 = arith.constant 2 : i32
    %7 = arith.addi %0, %c2_i32 : i32
    %8 = arith.index_cast %7 : i32 to index
    %9 = memref.load %arg2[%8] : memref<16xf32, #tpu.memory_space<smem>>
    %c3_i32 = arith.constant 3 : i32
    %10 = arith.addi %0, %c3_i32 : i32
    %11 = arith.index_cast %10 : i32 to index
    %12 = memref.load %arg2[%11] : memref<16xf32, #tpu.memory_space<smem>>
    %c4_i32 = arith.constant 4 : i32
    %13 = arith.addi %0, %c4_i32 : i32
    %14 = arith.index_cast %13 : i32 to index
    %15 = memref.load %arg2[%14] : memref<16xf32, #tpu.memory_space<smem>>
    %c0_i32_0 = arith.constant 0 : i32
    %16 = tpu.assume_multiple %c0_i32_0, 8 : i32
    %c0 = arith.constant 0 : index
    %17 = arith.index_cast %16 : i32 to index
    %c0_1 = arith.constant 0 : index
    %18 = vector.load %arg3[%c0, %17, %c0_1] : memref<3x8x128xf32, #tpu.memory_space<vmem>>, vector<1x8x128xf32>
    %19 = vector.shape_cast %18 : vector<1x8x128xf32> to vector<8x128xf32>
    %c1 = arith.constant 1 : index
    %20 = arith.index_cast %16 : i32 to index
    %c0_2 = arith.constant 0 : index
    %21 = vector.load %arg3[%c1, %20, %c0_2] : memref<3x8x128xf32, #tpu.memory_space<vmem>>, vector<1x8x128xf32>
    %22 = vector.shape_cast %21 : vector<1x8x128xf32> to vector<8x128xf32>
    %c2 = arith.constant 2 : index
    %23 = arith.index_cast %16 : i32 to index
    %c0_3 = arith.constant 0 : index
    %24 = vector.load %arg3[%c2, %23, %c0_3] : memref<3x8x128xf32, #tpu.memory_space<vmem>>, vector<1x8x128xf32>
    %25 = vector.shape_cast %24 : vector<1x8x128xf32> to vector<8x128xf32>
    %26 = vector.broadcast %15 : f32 to vector<8x128xf32>
    %27 = arith.subf %19, %26 : vector<8x128xf32>
    %28 = vector.broadcast %6 : f32 to vector<8x128xf32>
    %29 = arith.mulf %28, %27 : vector<8x128xf32>
    %30 = vector.broadcast %15 : f32 to vector<8x128xf32>
    %31 = arith.addf %30, %29 : vector<8x128xf32>
    %cst = arith.constant 0.000000e+00 : f32
    %cst_4 = arith.constant 1.000000e+00 : f32
    %32 = vector.broadcast %cst : f32 to vector<8x128xf32>
    %33 = arith.maximumf %32, %31 : vector<8x128xf32>
    %34 = vector.broadcast %cst_4 : f32 to vector<8x128xf32>
    %35 = arith.minimumf %34, %33 : vector<8x128xf32>
    %36 = vector.broadcast %15 : f32 to vector<8x128xf32>
    %37 = arith.subf %22, %36 : vector<8x128xf32>
    %38 = vector.broadcast %6 : f32 to vector<8x128xf32>
    %39 = arith.mulf %38, %37 : vector<8x128xf32>
    %40 = vector.broadcast %15 : f32 to vector<8x128xf32>
    %41 = arith.addf %40, %39 : vector<8x128xf32>
    %cst_5 = arith.constant 0.000000e+00 : f32
    %cst_6 = arith.constant 1.000000e+00 : f32
    %42 = vector.broadcast %cst_5 : f32 to vector<8x128xf32>
    %43 = arith.maximumf %42, %41 : vector<8x128xf32>
    %44 = vector.broadcast %cst_6 : f32 to vector<8x128xf32>
    %45 = arith.minimumf %44, %43 : vector<8x128xf32>
    %46 = vector.broadcast %15 : f32 to vector<8x128xf32>
    %47 = arith.subf %25, %46 : vector<8x128xf32>
    %48 = vector.broadcast %6 : f32 to vector<8x128xf32>
    %49 = arith.mulf %48, %47 : vector<8x128xf32>
    %50 = vector.broadcast %15 : f32 to vector<8x128xf32>
    %51 = arith.addf %50, %49 : vector<8x128xf32>
    %cst_7 = arith.constant 0.000000e+00 : f32
    %cst_8 = arith.constant 1.000000e+00 : f32
    %52 = vector.broadcast %cst_7 : f32 to vector<8x128xf32>
    %53 = arith.maximumf %52, %51 : vector<8x128xf32>
    %54 = vector.broadcast %cst_8 : f32 to vector<8x128xf32>
    %55 = arith.minimumf %54, %53 : vector<8x128xf32>
    %cst_9 = arith.constant 2.989000e-01 : f32
    %56 = vector.broadcast %cst_9 : f32 to vector<8x128xf32>
    %57 = arith.mulf %56, %35 : vector<8x128xf32>
    %cst_10 = arith.constant 5.870000e-01 : f32
    %58 = vector.broadcast %cst_10 : f32 to vector<8x128xf32>
    %59 = arith.mulf %58, %45 : vector<8x128xf32>
    %60 = arith.addf %57, %59 : vector<8x128xf32>
    %cst_11 = arith.constant 1.140000e-01 : f32
    %61 = vector.broadcast %cst_11 : f32 to vector<8x128xf32>
    %62 = arith.mulf %61, %55 : vector<8x128xf32>
    %63 = arith.addf %60, %62 : vector<8x128xf32>
    %64 = arith.subf %35, %63 : vector<8x128xf32>
    %65 = vector.broadcast %9 : f32 to vector<8x128xf32>
    %66 = arith.mulf %65, %64 : vector<8x128xf32>
    %67 = arith.addf %63, %66 : vector<8x128xf32>
    %cst_12 = arith.constant 0.000000e+00 : f32
    %cst_13 = arith.constant 1.000000e+00 : f32
    %68 = vector.broadcast %cst_12 : f32 to vector<8x128xf32>
    %69 = arith.maximumf %68, %67 : vector<8x128xf32>
    %70 = vector.broadcast %cst_13 : f32 to vector<8x128xf32>
    %71 = arith.minimumf %70, %69 : vector<8x128xf32>
    %72 = arith.subf %45, %63 : vector<8x128xf32>
    %73 = vector.broadcast %9 : f32 to vector<8x128xf32>
    %74 = arith.mulf %73, %72 : vector<8x128xf32>
    %75 = arith.addf %63, %74 : vector<8x128xf32>
    %cst_14 = arith.constant 0.000000e+00 : f32
    %cst_15 = arith.constant 1.000000e+00 : f32
    %76 = vector.broadcast %cst_14 : f32 to vector<8x128xf32>
    %77 = arith.maximumf %76, %75 : vector<8x128xf32>
    %78 = vector.broadcast %cst_15 : f32 to vector<8x128xf32>
    %79 = arith.minimumf %78, %77 : vector<8x128xf32>
    %80 = arith.subf %55, %63 : vector<8x128xf32>
    %81 = vector.broadcast %9 : f32 to vector<8x128xf32>
    %82 = arith.mulf %81, %80 : vector<8x128xf32>
    %83 = arith.addf %63, %82 : vector<8x128xf32>
    %cst_16 = arith.constant 0.000000e+00 : f32
    %cst_17 = arith.constant 1.000000e+00 : f32
    %84 = vector.broadcast %cst_16 : f32 to vector<8x128xf32>
    %85 = arith.maximumf %84, %83 : vector<8x128xf32>
    %86 = vector.broadcast %cst_17 : f32 to vector<8x128xf32>
    %87 = arith.minimumf %86, %85 : vector<8x128xf32>
    %88 = arith.cmpf oge, %71, %79 : vector<8x128xf32>
    %89 = arith.cmpf oge, %71, %87 : vector<8x128xf32>
    %90 = arith.andi %88, %89 : vector<8x128xi1>
    %cst_18 = arith.constant dense<true> : vector<8x128xi1>
    %91 = arith.xori %90, %cst_18 : vector<8x128xi1>
    %92 = arith.cmpf oge, %79, %87 : vector<8x128xf32>
    %93 = arith.andi %91, %92 : vector<8x128xi1>
    %94 = arith.select %93, %79, %87 : vector<8x128xi1>, vector<8x128xf32>
    %95 = arith.select %90, %71, %94 : vector<8x128xi1>, vector<8x128xf32>
    %96 = arith.minimumf %71, %79 : vector<8x128xf32>
    %97 = arith.minimumf %96, %87 : vector<8x128xf32>
    %98 = arith.subf %95, %97 : vector<8x128xf32>
    %cst_19 = arith.constant 0.000000e+00 : f32
    %99 = vector.broadcast %cst_19 : f32 to vector<8x128xf32>
    %100 = arith.cmpf oeq, %98, %99 : vector<8x128xf32>
    %cst_20 = arith.constant 1.000000e+00 : f32
    %101 = vector.broadcast %cst_20 : f32 to vector<8x128xf32>
    %102 = arith.select %100, %101, %95 : vector<8x128xi1>, vector<8x128xf32>
    %103 = arith.divf %98, %102 : vector<8x128xf32>
    %cst_21 = arith.constant 1.000000e+00 : f32
    %104 = vector.broadcast %cst_21 : f32 to vector<8x128xf32>
    %105 = arith.select %100, %104, %98 : vector<8x128xi1>, vector<8x128xf32>
    %cst_22 = arith.constant 1.000000e+00 : f32
    %106 = vector.broadcast %cst_22 : f32 to vector<8x128xf32>
    %107 = arith.divf %106, %105 : vector<8x128xf32>
    %108 = arith.subf %95, %71 : vector<8x128xf32>
    %109 = arith.mulf %108, %107 : vector<8x128xf32>
    %110 = arith.subf %95, %79 : vector<8x128xf32>
    %111 = arith.mulf %110, %107 : vector<8x128xf32>
    %112 = arith.subf %95, %87 : vector<8x128xf32>
    %113 = arith.mulf %112, %107 : vector<8x128xf32>
    %114 = arith.subf %113, %111 : vector<8x128xf32>
    %cst_23 = arith.constant 0.000000e+00 : f32
    %115 = vector.broadcast %cst_23 : f32 to vector<8x128xf32>
    %116 = arith.select %90, %114, %115 : vector<8x128xi1>, vector<8x128xf32>
    %cst_24 = arith.constant 2.000000e+00 : f32
    %117 = vector.broadcast %cst_24 : f32 to vector<8x128xf32>
    %118 = arith.addf %117, %109 : vector<8x128xf32>
    %119 = arith.subf %118, %113 : vector<8x128xf32>
    %cst_25 = arith.constant 0.000000e+00 : f32
    %120 = vector.broadcast %cst_25 : f32 to vector<8x128xf32>
    %121 = arith.select %93, %119, %120 : vector<8x128xi1>, vector<8x128xf32>
    %cst_26 = arith.constant dense<true> : vector<8x128xi1>
    %122 = arith.xori %90, %cst_26 : vector<8x128xi1>
    %cst_27 = arith.constant dense<true> : vector<8x128xi1>
    %123 = arith.xori %93, %cst_27 : vector<8x128xi1>
    %124 = arith.andi %122, %123 : vector<8x128xi1>
    %cst_28 = arith.constant 4.000000e+00 : f32
    %125 = vector.broadcast %cst_28 : f32 to vector<8x128xf32>
    %126 = arith.addf %125, %111 : vector<8x128xf32>
    %127 = arith.subf %126, %109 : vector<8x128xf32>
    %cst_29 = arith.constant 0.000000e+00 : f32
    %128 = vector.broadcast %cst_29 : f32 to vector<8x128xf32>
    %129 = arith.select %124, %127, %128 : vector<8x128xi1>, vector<8x128xf32>
    %130 = arith.addf %116, %121 : vector<8x128xf32>
    %131 = arith.addf %130, %129 : vector<8x128xf32>
    %cst_30 = arith.constant 0.166666672 : f32
    %132 = vector.broadcast %cst_30 : f32 to vector<8x128xf32>
    %133 = arith.mulf %131, %132 : vector<8x128xf32>
    %cst_31 = arith.constant 1.000000e+00 : f32
    %134 = arith.addf %12, %cst_31 : f32
    %135 = vector.broadcast %134 : f32 to vector<8x128xf32>
    %136 = arith.addf %133, %135 : vector<8x128xf32>
    %137 = math.floor %136 : vector<8x128xf32>
    %138 = arith.subf %136, %137 : vector<8x128xf32>
    %cst_32 = arith.constant 6.000000e+00 : f32
    %139 = vector.broadcast %cst_32 : f32 to vector<8x128xf32>
    %140 = arith.mulf %139, %138 : vector<8x128xf32>
    %141 = arith.mulf %95, %103 : vector<8x128xf32>
    %cst_33 = arith.constant 5.000000e+00 : f32
    %142 = vector.broadcast %cst_33 : f32 to vector<8x128xf32>
    %143 = arith.addf %142, %140 : vector<8x128xf32>
    %cst_34 = arith.constant 6.000000e+00 : f32
    %144 = vector.broadcast %cst_34 : f32 to vector<8x128xf32>
    %145 = arith.cmpf oge, %143, %144 : vector<8x128xf32>
    %cst_35 = arith.constant 6.000000e+00 : f32
    %146 = vector.broadcast %cst_35 : f32 to vector<8x128xf32>
    %147 = arith.subf %143, %146 : vector<8x128xf32>
    %148 = arith.select %145, %147, %143 : vector<8x128xi1>, vector<8x128xf32>
    %cst_36 = arith.constant 4.000000e+00 : f32
    %149 = vector.broadcast %cst_36 : f32 to vector<8x128xf32>
    %150 = arith.subf %149, %148 : vector<8x128xf32>
    %151 = arith.minimumf %148, %150 : vector<8x128xf32>
    %cst_37 = arith.constant 0.000000e+00 : f32
    %cst_38 = arith.constant 1.000000e+00 : f32
    %152 = vector.broadcast %cst_37 : f32 to vector<8x128xf32>
    %153 = arith.maximumf %152, %151 : vector<8x128xf32>
    %154 = vector.broadcast %cst_38 : f32 to vector<8x128xf32>
    %155 = arith.minimumf %154, %153 : vector<8x128xf32>
    %156 = arith.mulf %141, %155 : vector<8x128xf32>
    %157 = arith.subf %95, %156 : vector<8x128xf32>
    %cst_39 = arith.constant 3.000000e+00 : f32
    %158 = vector.broadcast %cst_39 : f32 to vector<8x128xf32>
    %159 = arith.addf %158, %140 : vector<8x128xf32>
    %cst_40 = arith.constant 6.000000e+00 : f32
    %160 = vector.broadcast %cst_40 : f32 to vector<8x128xf32>
    %161 = arith.cmpf oge, %159, %160 : vector<8x128xf32>
    %cst_41 = arith.constant 6.000000e+00 : f32
    %162 = vector.broadcast %cst_41 : f32 to vector<8x128xf32>
    %163 = arith.subf %159, %162 : vector<8x128xf32>
    %164 = arith.select %161, %163, %159 : vector<8x128xi1>, vector<8x128xf32>
    %cst_42 = arith.constant 4.000000e+00 : f32
    %165 = vector.broadcast %cst_42 : f32 to vector<8x128xf32>
    %166 = arith.subf %165, %164 : vector<8x128xf32>
    %167 = arith.minimumf %164, %166 : vector<8x128xf32>
    %cst_43 = arith.constant 0.000000e+00 : f32
    %cst_44 = arith.constant 1.000000e+00 : f32
    %168 = vector.broadcast %cst_43 : f32 to vector<8x128xf32>
    %169 = arith.maximumf %168, %167 : vector<8x128xf32>
    %170 = vector.broadcast %cst_44 : f32 to vector<8x128xf32>
    %171 = arith.minimumf %170, %169 : vector<8x128xf32>
    %172 = arith.mulf %141, %171 : vector<8x128xf32>
    %173 = arith.subf %95, %172 : vector<8x128xf32>
    %cst_45 = arith.constant 1.000000e+00 : f32
    %174 = vector.broadcast %cst_45 : f32 to vector<8x128xf32>
    %175 = arith.addf %174, %140 : vector<8x128xf32>
    %cst_46 = arith.constant 6.000000e+00 : f32
    %176 = vector.broadcast %cst_46 : f32 to vector<8x128xf32>
    %177 = arith.cmpf oge, %175, %176 : vector<8x128xf32>
    %cst_47 = arith.constant 6.000000e+00 : f32
    %178 = vector.broadcast %cst_47 : f32 to vector<8x128xf32>
    %179 = arith.subf %175, %178 : vector<8x128xf32>
    %180 = arith.select %177, %179, %175 : vector<8x128xi1>, vector<8x128xf32>
    %cst_48 = arith.constant 4.000000e+00 : f32
    %181 = vector.broadcast %cst_48 : f32 to vector<8x128xf32>
    %182 = arith.subf %181, %180 : vector<8x128xf32>
    %183 = arith.minimumf %180, %182 : vector<8x128xf32>
    %cst_49 = arith.constant 0.000000e+00 : f32
    %cst_50 = arith.constant 1.000000e+00 : f32
    %184 = vector.broadcast %cst_49 : f32 to vector<8x128xf32>
    %185 = arith.maximumf %184, %183 : vector<8x128xf32>
    %186 = vector.broadcast %cst_50 : f32 to vector<8x128xf32>
    %187 = arith.minimumf %186, %185 : vector<8x128xf32>
    %188 = arith.mulf %141, %187 : vector<8x128xf32>
    %189 = arith.subf %95, %188 : vector<8x128xf32>
    %190 = vector.broadcast %3 : f32 to vector<8x128xf32>
    %191 = arith.mulf %190, %157 : vector<8x128xf32>
    %cst_51 = arith.constant 0.000000e+00 : f32
    %cst_52 = arith.constant 1.000000e+00 : f32
    %192 = vector.broadcast %cst_51 : f32 to vector<8x128xf32>
    %193 = arith.maximumf %192, %191 : vector<8x128xf32>
    %194 = vector.broadcast %cst_52 : f32 to vector<8x128xf32>
    %195 = arith.minimumf %194, %193 : vector<8x128xf32>
    %196 = vector.broadcast %3 : f32 to vector<8x128xf32>
    %197 = arith.mulf %196, %173 : vector<8x128xf32>
    %cst_53 = arith.constant 0.000000e+00 : f32
    %cst_54 = arith.constant 1.000000e+00 : f32
    %198 = vector.broadcast %cst_53 : f32 to vector<8x128xf32>
    %199 = arith.maximumf %198, %197 : vector<8x128xf32>
    %200 = vector.broadcast %cst_54 : f32 to vector<8x128xf32>
    %201 = arith.minimumf %200, %199 : vector<8x128xf32>
    %202 = vector.broadcast %3 : f32 to vector<8x128xf32>
    %203 = arith.mulf %202, %189 : vector<8x128xf32>
    %cst_55 = arith.constant 0.000000e+00 : f32
    %cst_56 = arith.constant 1.000000e+00 : f32
    %204 = vector.broadcast %cst_55 : f32 to vector<8x128xf32>
    %205 = arith.maximumf %204, %203 : vector<8x128xf32>
    %206 = vector.broadcast %cst_56 : f32 to vector<8x128xf32>
    %207 = arith.minimumf %206, %205 : vector<8x128xf32>
    %c0_57 = arith.constant 0 : index
    %208 = arith.index_cast %16 : i32 to index
    %c0_58 = arith.constant 0 : index
    %209 = vector.load %arg4[%c0_57, %208, %c0_58] : memref<3x8x128xf32, #tpu.memory_space<vmem>>, vector<1x8x128xf32>
    %210 = vector.shape_cast %209 : vector<1x8x128xf32> to vector<8x128xf32>
    %211 = vector.shape_cast %195 : vector<8x128xf32> to vector<1x8x128xf32>
    tpu.vector_store %arg4[%c0_57, %208, %c0_58], %211 {strides = array<i32>} : memref<3x8x128xf32, #tpu.memory_space<vmem>>, vector<1x8x128xf32>,
    %c1_59 = arith.constant 1 : index
    %212 = arith.index_cast %16 : i32 to index
    %c0_60 = arith.constant 0 : index
    %213 = vector.load %arg4[%c1_59, %212, %c0_60] : memref<3x8x128xf32, #tpu.memory_space<vmem>>, vector<1x8x128xf32>
    %214 = vector.shape_cast %213 : vector<1x8x128xf32> to vector<8x128xf32>
    %215 = vector.shape_cast %201 : vector<8x128xf32> to vector<1x8x128xf32>
    tpu.vector_store %arg4[%c1_59, %212, %c0_60], %215 {strides = array<i32>} : memref<3x8x128xf32, #tpu.memory_space<vmem>>, vector<1x8x128xf32>,
    %c2_61 = arith.constant 2 : index
    %216 = arith.index_cast %16 : i32 to index
    %c0_62 = arith.constant 0 : index
    %217 = vector.load %arg4[%c2_61, %216, %c0_62] : memref<3x8x128xf32, #tpu.memory_space<vmem>>, vector<1x8x128xf32>
    %218 = vector.shape_cast %217 : vector<1x8x128xf32> to vector<8x128xf32>
    %219 = vector.shape_cast %207 : vector<8x128xf32> to vector<1x8x128xf32>
    tpu.vector_store %arg4[%c2_61, %216, %c0_62], %219 {strides = array<i32>} : memref<3x8x128xf32, #tpu.memory_space<vmem>>, vector<1x8x128xf32>,
    return
  }
  func.func @transform_0(%arg0: i32, %arg1: i32) -> i32 {
    %c0_i32 = arith.constant 0 : i32
    %c0_i32_0 = arith.constant 0 : i32
    return %c0_i32 : i32
  }
  func.func @transform_1(%arg0: i32, %arg1: i32) -> (i32, i32, i32) {
    %c0_i32 = arith.constant 0 : i32
    %c0_i32_0 = arith.constant 0 : i32
    return %arg0, %arg1, %c0_i32 : i32, i32, i32
  }
  func.func @transform_2(%arg0: i32, %arg1: i32) -> (i32, i32, i32) {
    %c0_i32 = arith.constant 0 : i32
    %c0_i32_0 = arith.constant 0 : i32
    return %arg0, %arg1, %c0_i32 : i32, i32, i32
  }
}

</mosaic_0001>

<llo_original>
// kernel: color_jitter_pallas.1
$region0: #{color_jitter_pallas.1}
  #allocation0 [shape = 'u32[]', space=smem, size = 0x4, offset = 0x4, fixed_abs, tag = 'smem constant byte address 0x4 - core index']
  #allocation1 [shape = 'u32[72,128]{1,0:T(1,128)}', space=vmem, size = 0x9000, scoped, tag = 'internal scratch']
  %s0 = inlined_call_operand.vmem [shape: f32[16], index: 0, kind: input, shape index: {}]
  %s1 = inlined_call_operand.vmem [shape: f32[6,8,128], index: 1, kind: input, shape index: {}]
  %s2 = inlined_call_operand.vmem [shape: f32[6,8,128], index: 2, kind: output, shape index: {}]
  %s3 = sld [smem:[#allocation0]]
  $region45: #{color_jitter_pallas.1} parent=0
    _
  %s5 = ssub.s32 1, %s3
  %s6 = scalar_select 0, %s5, %s3
  $region1: #{color_jitter_pallas.1} parent=0
    #allocation2 [shape = 'u8[512]{0}', space=smem, size = 0x200, scoped, tag = 'input window, operand 0, single buffered']
    #allocation3 [shape = 's32[2]{0}', space=sflag, size = 0x8, scoped, tag = 'scoped memory for color_jitter_pallas.1']
    %7 = vsyncpa [#allocation3], 0
    loop: start=0, step=1, limit=4
    $region2: #{color_jitter_pallas.1} parent=1 // loop_pre_header
      _
    $region3: #{color_jitter_pallas.1} parent=1 // loop_header
      %s9 = sphi 0, %s13
      %p10 = scmp.ge.s32.totalorder %s9, 4
      %s16 = sphi 0, %s28
      %s17 = sphi 0, %s24
      %s18 = sphi 0, %s16
      %s19 = sphi 0, %s17
      %s20 = sphi 0, %s18
      %s21 = sphi 0, %s19
      %s29 = sphi 0, %s29
      %s31 = sphi 0, %s29
      %s32 = sphi 0, %s31
      %s46 = sphi 0, %s32
      %s54 = sphi 0, %s56
      %s57 = sphi 0, %s54
      %s58 = sphi 0, %s57
      %s74 = sphi 0, %s58
      %s82 = sphi 0, %s84
      %s85 = sphi 0, %s82
      %s86 = sphi 0, %s85
      %s102 = sphi 0, %s86
    $region4: #{color_jitter_pallas.1} parent=1 // loop_header_branch
      %12 = sbr.rel (%p10) target = $region8
    $region5: #{color_jitter_pallas.1} parent=1 // loop_body
      %s14 = ssub.s32 %s9, 1
      %s15 = ssub.s32 %s9, 2
      %s22 = sadd.s32 1, %s17
      %p23 = scmp.ge.s32.totalorder %s22, 1
      %s24 = scalar_select %p23, 0, %s22
      %s25 = sadd.s32 1, %s16
      %s26 = scalar_select %p23, %s25, %s16
      %p27 = scmp.ge.s32.totalorder %s26, 2
      %s28 = scalar_select %p27, 0, %s26
      %s30 = sadd.s32 %s29, 1
      %p33 = scmp.eq.s32.totalorder %s9, 1
      %p34 = scmp.ne.s32.totalorder %s29, %s31
      %p35 = scmp.eq.s32.totalorder %s9, 0
      %p36 = por %p34, %p35
      %p37 = scmp.ne.s32.totalorder %s29, %s31
      %p38 = scmp.eq.s32.totalorder %s14, 1
      %p39 = por %p37, %p38
      %p40 = scmp.ne.s32.totalorder %s31, %s32
      %p41 = scmp.eq.s32.totalorder %s14, 0
      %p42 = por %p40, %p41
      %p43 = scmp.ne.s32.totalorder %s31, %s32
      %p44 = scmp.eq.s32.totalorder %s15, 1
      %p45 = por %p43, %p44
      %p47 = scmp.ne.s32.totalorder %s32, %s46
      %p48 = scmp.eq.s32.totalorder %s15, 0
      %p49 = por %p47, %p48
      %s50 = ssub.s32 %s16, %s28
      %s51 = ssub.s32 %s17, %s24
      %s52 = sor.u32 %s50, %s51
      %p53 = scmp.eq.s32.totalorder %s52, 0
      %s55 = sadd.s32 %s54, 1
      %s56 = scalar_select %p53, %s54, %s55
      %p59 = pneg %p53
      %p60 = scmp.eq.s32.totalorder %s9, 1
      %p61 = por %p59, %p60
      %p62 = scmp.ne.s32.totalorder %s54, %s57
      %p63 = scmp.eq.s32.totalorder %s9, 0
      %p64 = por %p62, %p63
      %p65 = scmp.ne.s32.totalorder %s54, %s57
      %p66 = scmp.eq.s32.totalorder %s14, 1
      %p67 = por %p65, %p66
      %p68 = scmp.ne.s32.totalorder %s57, %s58
      %p69 = scmp.eq.s32.totalorder %s14, 0
      %p70 = por %p68, %p69
      %p71 = scmp.ne.s32.totalorder %s57, %s58
      %p72 = scmp.eq.s32.totalorder %s15, 1
      %p73 = por %p71, %p72
      %p75 = scmp.ne.s32.totalorder %s58, %s74
      %p76 = scmp.eq.s32.totalorder %s15, 0
      %p77 = por %p75, %p76
      %s78 = ssub.s32 %s16, %s28
      %s79 = ssub.s32 %s17, %s24
      %s80 = sor.u32 %s78, %s79
      %p81 = scmp.eq.s32.totalorder %s80, 0
      %s83 = sadd.s32 %s82, 1
      %s84 = scalar_select %p81, %s82, %s83
      %p87 = pneg %p81
      %p88 = scmp.eq.s32.totalorder %s9, 1
      %p89 = por %p87, %p88
      %p90 = scmp.ne.s32.totalorder %s82, %s85
      %p91 = scmp.eq.s32.totalorder %s9, 0
      %p92 = por %p90, %p91
      %p93 = scmp.ne.s32.totalorder %s82, %s85
      %p94 = scmp.eq.s32.totalorder %s14, 1
      %p95 = por %p93, %p94
      %p96 = scmp.ne.s32.totalorder %s85, %s86
      %p97 = scmp.eq.s32.totalorder %s14, 0
      %p98 = por %p96, %p97
      %p99 = scmp.ne.s32.totalorder %s85, %s86
      %p100 = scmp.eq.s32.totalorder %s15, 1
      %p101 = por %p99, %p100
      %p103 = scmp.ne.s32.totalorder %s86, %s102
      %p104 = scmp.eq.s32.totalorder %s15, 0
      %p105 = por %p103, %p104
      %p106 = scmp.le.s32.totalorder 1, %s9
      %p107 = scmp.lt.s32.totalorder %s9, 3
      %p108 = pnand %p106, %p107
      %p109 = pneg %p108
      // Predicated region
      $region9: #{color_jitter_pallas.1} parent=5 // pred_check
        _
      $region10: #{color_jitter_pallas.1} parent=5 // pred_check_branch
        %111 = sbr.rel (%p108) target = $region12
      $region11: #{color_jitter_pallas.1} parent=5 // pred_region
        %s112 = ssub.s32 %s9, 1
        // Predicated region
        $region13: #{color_jitter_pallas.1} parent=11 // pred_check
          %p113 = pneg %p42
        $region14: #{color_jitter_pallas.1} parent=11 // pred_check_branch
          %115 = sbr.rel (%p113) target = $region16
        $region15: #{color_jitter_pallas.1} parent=11 // pred_region
          %117 = vsyncadd [#allocation3], 0
          %s119 = sshll.u32 %s0, 4
          %s120 = int_to_ptr.vmem [resolvable:$true] %s119
          %122 = dma.vmem_to_smem %s120, 16, [#allocation2], [#allocation3]
        $region16: #{color_jitter_pallas.1} parent=11 // pred_fallthru
          _
      $region12: #{color_jitter_pallas.1} parent=5 // pred_fallthru
        _
      %p123 = scmp.lt.s32.totalorder %s9, 2
      // Predicated region
      $region17: #{color_jitter_pallas.1} parent=5 // pred_check
        %p124 = pneg %p123
      $region18: #{color_jitter_pallas.1} parent=5 // pred_check_branch
        %126 = sbr.rel (%p124) target = $region20
      $region19: #{color_jitter_pallas.1} parent=5 // pred_region
        // Predicated region
        $region21: #{color_jitter_pallas.1} parent=19 // pred_check
          %p127 = pneg %p64
        $region22: #{color_jitter_pallas.1} parent=19 // pred_check_branch
          %129 = sbr.rel (%p127) target = $region24
        $region23: #{color_jitter_pallas.1} parent=19 // pred_region
          %s130 = smul.u32 3, %s16
          %p131 = scmp.lt.s32.totalorder %s130, 5
          %s132 = scalar_select %p131, %s130, 5
          %p133 = scmp.lt.s32.totalorder %s17, 0
          %s134 = scalar_select %p133, %s17, 0
          %s135 = sadd.s32 %s134, %s132
          %s136 = smul.addr %s135, 8
          %s137 = scalar_lea.vmem %s1, %s136
          %s138 = smul.u32 3, %s16
        $region24: #{color_jitter_pallas.1} parent=19 // pred_fallthru
          _
      $region20: #{color_jitter_pallas.1} parent=5 // pred_fallthru
        _
      %p139 = scmp.le.s32.totalorder 1, %s9
      %p140 = scmp.lt.s32.totalorder %s9, 3
      %p141 = pnand %p139, %p140
      %p142 = pneg %p141
      // Predicated region
      $region25: #{color_jitter_pallas.1} parent=5 // pred_check
        _
      $region26: #{color_jitter_pallas.1} parent=5 // pred_check_branch
        %144 = sbr.rel (%p141) target = $region28
      $region27: #{color_jitter_pallas.1} parent=5 // pred_region
        %s145 = ssub.s32 %s9, 1
        // Predicated region
        $region29: #{color_jitter_pallas.1} parent=27 // pred_check
          %p146 = pneg %p42
        $region30: #{color_jitter_pallas.1} parent=27 // pred_check_branch
          %148 = sbr.rel (%p146) target = $region32
        $region31: #{color_jitter_pallas.1} parent=27 // pred_region
          %150 = dma.done [#allocation3], 16
        $region32: #{color_jitter_pallas.1} parent=27 // pred_fallthru
          _
        %151 = sfence
        %p152 = pneg %p42
        %p153 = pneg %p39
        %s154 = smul.u32 3, %s18
        %p155 = scmp.lt.s32.totalorder %s154, 5
        %s156 = scalar_select %p155, %s154, 5
        %p157 = scmp.lt.s32.totalorder %s19, 0
        %s158 = scalar_select %p157, %s19, 0
        %s159 = sadd.s32 %s158, %s156
        %s160 = smul.addr %s159, 8
        %s161 = scalar_lea.vmem %s1, %s160
        %p162 = pneg %p70
        %p163 = pneg %p67
        %p164 = pneg %p98
        %p165 = pneg %p95
        %s166 = smul.u32 3, %s18
        %p167 = scmp.lt.s32.totalorder %s166, 5
        %s168 = scalar_select %p167, %s166, 5
        %p169 = scmp.lt.s32.totalorder %s19, 0
        %s170 = scalar_select %p169, %s19, 0
        %s171 = sadd.s32 %s170, %s168
        %s172 = smul.addr %s171, 8
        %s173 = scalar_lea.vmem %s2, %s172
        %s174 = smul.u32 3, %s18
        %p175 = scmp.lt.s32.totalorder %s174, 5
        %s176 = scalar_select %p175, %s174, 5
        %p177 = scmp.lt.s32.totalorder %s19, 0
        %s178 = scalar_select %p177, %s19, 0
        %s179 = sadd.s32 %s178, %s176
        %s180 = smul.addr %s179, 8
        %s181 = scalar_lea.vmem %s1, %s180
        %s182 = smul.u32 3, %s18
        %s183 = smul.u32 3, %s18
        %p184 = scmp.lt.s32.totalorder %s183, 5
        %s185 = scalar_select %p184, %s183, 5
        %p186 = scmp.lt.s32.totalorder %s19, 0
        %s187 = scalar_select %p186, %s19, 0
        %s188 = sadd.s32 %s187, %s185
        %s189 = smul.addr %s188, 8
        %s190 = scalar_lea.vmem %s2, %s189
        %s191 = smul.u32 3, %s18
        %s192 = smul.u32 %s18, 8
        %s193 = sld [smem:[#allocation2 + %s192]]
        %s194 = sadd.s32 %s192, 1
        %s195 = sld [smem:[#allocation2 + %s194]]
        %s196 = sadd.s32 %s192, 2
        %s197 = sld [smem:[#allocation2 + %s196]]
        %s198 = sadd.s32 %s192, 3
        %s199 = sld [smem:[#allocation2 + %s198]]
        %s200 = sadd.s32 %s192, 4
        %s201 = sld [smem:[#allocation2 + %s200]]
        %v202 = vld [vmem:[%s181] sm:$0xff]
        %s203 = sadd.s32 0, 8
        %s204 = scalar_lea.vmem %s181, %s203
        %v205 = vld [vmem:[%s204] sm:$0xff]
        %s206 = sadd.s32 0, 16
        %s207 = scalar_lea.vmem %s181, %s206
        %v208 = vld [vmem:[%s207] sm:$0xff]
        %v209 = vstv %s201
        %v210 = vsub.f32 %v202, %v209
        %v211 = vstv %s195
        %v212 = vmul.f32 %v211, %v210
        %v213 = vadd.f32 %v209, %v212
        %v214 = vmax.f32 %v213, 0.0
        %v215 = vmin.f32 %v214, 1.0
        %v216 = vsub.f32 %v205, %v209
        %v217 = vmul.f32 %v211, %v216
        %v218 = vadd.f32 %v209, %v217
        %v219 = vmax.f32 %v218, 0.0
        %v220 = vmin.f32 %v219, 1.0
        %v221 = vsub.f32 %v208, %v209
        %v222 = vmul.f32 %v211, %v221
        %v223 = vadd.f32 %v209, %v222
        %v224 = vmax.f32 %v223, 0.0
        %v225 = vmin.f32 %v224, 1.0
        %v226 = vmul.f32 %v215, 0.2989
        %v227 = vmul.f32 %v220, 0.587
        %v228 = vadd.f32 %v226, %v227
        %v229 = vmul.f32 %v225, 0.114
        %v230 = vadd.f32 %v228, %v229
        %v231 = vsub.f32 %v215, %v230
        %v232 = vstv %s197
        %v233 = vmul.f32 %v232, %v231
        %v234 = vadd.f32 %v230, %v233
        %v235 = vmax.f32 %v234, 0.0
        %v236 = vmin.f32 %v235, 1.0
        %v237 = vsub.f32 %v220, %v230
        %v238 = vmul.f32 %v232, %v237
        %v239 = vadd.f32 %v230, %v238
        %v240 = vmax.f32 %v239, 0.0
        %v241 = vmin.f32 %v240, 1.0
        %v242 = vsub.f32 %v225, %v230
        %v243 = vmul.f32 %v232, %v242
        %v244 = vadd.f32 %v230, %v243
        %v245 = vmax.f32 %v244, 0.0
        %v246 = vmin.f32 %v245, 1.0
        %vm247 = vcmp.ge.f32.partialorder %v236, %v241
        %vm248 = vcmp.ge.f32.partialorder %v236, %v246
        %vm249 = vmand %vm247, %vm248
        %vm250 = vmxor %vm249, 1
        %vm251 = vcmp.ge.f32.partialorder %v241, %v246
        %vm252 = vmand %vm250, %vm251
        %v253 = vsel %vm252, %v241, %v246
        %v254 = vsel %vm249, %v236, %v253
        %v255 = vmin.f32 %v236, %v241
        %v256 = vmin.f32 %v255, %v246
        %v257 = vsub.f32 %v254, %v256
        %vm258 = vcmp.eq.f32.partialorder %v257, 0.0
        %v259 = vsel %vm258, 1.0, %v254
        %v260 = vrcp.pop %v259
        %v261 = vmul.f32 %v259, %v260
        %v262 = vsub.f32 1.0, %v261
        %v263 = vmul.f32 %v260, %v262
        %v264 = vadd.f32 %v260, %v263
        %vm265 = vweird.f32 %v259
        %vm266 = vweird.f32 %v260
        %vm267 = vmor %vm265, %vm266
        %v268 = vsel %vm267, %v260, %v264
        %v269 = vand.u32 2147483647, %v259
        %vm270 = vcmp.eq.f32.partialorder %v269, 8.507059e+37
        %v271 = vand.u32 %v259, 2147483648
        %v272 = vor.u32 1.1754944e-38, %v271
        %v273 = vsel %vm270, %v272, %v268
        %v274 = vmul.f32 %v257, %v273
        %v275 = vsel %vm258, 1.0, %v257
        %v276 = vrcp.pop %v275
        %v277 = vmul.f32 %v275, %v276
        %v278 = vsub.f32 1.0, %v277
        %v279 = vmul.f32 %v276, %v278
        %v280 = vadd.f32 %v276, %v279
        %vm281 = vweird.f32 %v275
        %vm282 = vweird.f32 %v276
        %vm283 = vmor %vm281, %vm282
        %v284 = vsel %vm283, %v276, %v280
        %v285 = vand.u32 2147483647, %v275
        %vm286 = vcmp.eq.f32.partialorder %v285, 8.507059e+37
        %v287 = vand.u32 %v275, 2147483648
        %v288 = vor.u32 1.1754944e-38, %v287
        %v289 = vsel %vm286, %v288, %v284
        %v290 = vmul.f32 1.0, %v289
        %v291 = vsub.f32 %v254, %v236
        %v292 = vmul.f32 %v291, %v290
        %v293 = vsub.f32 %v254, %v241
        %v294 = vmul.f32 %v293, %v290
        %v295 = vsub.f32 %v254, %v246
        %v296 = vmul.f32 %v295, %v290
        %v297 = vsub.f32 %v296, %v294
        %v298 = vsel %vm249, %v297, 0.0
        %v299 = vadd.f32 %v292, 2.0
        %v300 = vsub.f32 %v299, %v296
        %v301 = vsel %vm252, %v300, 0.0
        %vm302 = vmxor %vm252, 1
        %vm303 = vmand %vm250, %vm302
        %v304 = vadd.f32 %v294, 4.0
        %v305 = vsub.f32 %v304, %v292
        %v306 = vsel %vm303, %v305, 0.0
        %v307 = vadd.f32 %v298, %v301
        %v308 = vadd.f32 %v307, %v306
        %v309 = vmul.f32 %v308, 0.16666667
        %s310 = sadd.f32 %s199, 1.0
        %v311 = vstv %s310
        %v312 = vadd.f32 %v309, %v311
        %v313 = vfloor.f32 %v312
        %v314 = vsub.f32 %v312, %v313
        %v315 = vmul.f32 %v314, 6.0
        %v316 = vmul.f32 %v254, %v274
        %v317 = vadd.f32 %v315, 5.0
        %vm318 = vcmp.ge.f32.partialorder %v317, 6.0
        %v319 = vsub.f32 %v317, 6.0
        %v320 = vsel %vm318, %v319, %v317
        %v321 = vsub.f32 4.0, %v320
        %v322 = vmin.f32 %v320, %v321
        %v323 = vmax.f32 %v322, 0.0
        %v324 = vmin.f32 %v323, 1.0
        %v325 = vmul.f32 %v316, %v324
        %v326 = vsub.f32 %v254, %v325
        %v327 = vadd.f32 %v315, 3.0
        %vm328 = vcmp.ge.f32.partialorder %v327, 6.0
        %v329 = vsub.f32 %v327, 6.0
        %v330 = vsel %vm328, %v329, %v327
        %v331 = vsub.f32 4.0, %v330
        %v332 = vmin.f32 %v330, %v331
        %v333 = vmax.f32 %v332, 0.0
        %v334 = vmin.f32 %v333, 1.0
        %v335 = vmul.f32 %v316, %v334
        %v336 = vsub.f32 %v254, %v335
        %v337 = vadd.f32 %v315, 1.0
        %vm338 = vcmp.ge.f32.partialorder %v337, 6.0
        %v339 = vsub.f32 %v337, 6.0
        %v340 = vsel %vm338, %v339, %v337
        %v341 = vsub.f32 4.0, %v340
        %v342 = vmin.f32 %v340, %v341
        %v343 = vmax.f32 %v342, 0.0
        %v344 = vmin.f32 %v343, 1.0
        %v345 = vmul.f32 %v316, %v344
        %v346 = vsub.f32 %v254, %v345
        %v347 = vstv %s193
        %v348 = vmul.f32 %v347, %v326
        %v349 = vmax.f32 %v348, 0.0
        %v350 = vmin.f32 %v349, 1.0
        %v351 = vmul.f32 %v347, %v336
        %v352 = vmax.f32 %v351, 0.0
        %v353 = vmin.f32 %v352, 1.0
        %v354 = vmul.f32 %v347, %v346
        %v355 = vmax.f32 %v354, 0.0
        %v356 = vmin.f32 %v355, 1.0
        %357 = vst [vmem:[%s190] sm:$0xff] %v350
        %s358 = scalar_lea.vmem %s190, %s203
        %359 = vst [vmem:[%s358] sm:$0xff] %v353
        %s360 = scalar_lea.vmem %s190, %s206
        %361 = vst [vmem:[%s360] sm:$0xff] %v356
        %s362 = smul.u32 3, %s18
        %p363 = scmp.lt.s32.totalorder %s362, 5
        %s364 = scalar_select %p363, %s362, 5
        %p365 = scmp.lt.s32.totalorder %s19, 0
        %s366 = scalar_select %p365, %s19, 0
        %s367 = sadd.s32 %s366, %s364
        %s368 = smul.addr %s367, 8
        %s369 = scalar_lea.vmem %s2, %s368
        // Predicated region
        $region33: #{color_jitter_pallas.1} parent=27 // pred_check
          %p370 = pneg %p95
        $region34: #{color_jitter_pallas.1} parent=27 // pred_check_branch
          %372 = sbr.rel (%p370) target = $region36
        $region35: #{color_jitter_pallas.1} parent=27 // pred_region
          %s373 = smul.u32 3, %s18
        $region36: #{color_jitter_pallas.1} parent=27 // pred_fallthru
          _
      $region28: #{color_jitter_pallas.1} parent=5 // pred_fallthru
        _
      %p374 = scmp.le.s32.totalorder 2, %s9
      // Predicated region
      $region37: #{color_jitter_pallas.1} parent=5 // pred_check
        %p375 = pneg %p374
      $region38: #{color_jitter_pallas.1} parent=5 // pred_check_branch
        %377 = sbr.rel (%p375) target = $region40
      $region39: #{color_jitter_pallas.1} parent=5 // pred_region
        %s378 = ssub.s32 %s9, 2
        // Predicated region
        $region41: #{color_jitter_pallas.1} parent=39 // pred_check
          %p379 = pneg %p101
        $region42: #{color_jitter_pallas.1} parent=39 // pred_check_branch
          %381 = sbr.rel (%p379) target = $region44
        $region43: #{color_jitter_pallas.1} parent=39 // pred_region
          %s382 = smul.u32 3, %s20
          %p383 = scmp.lt.s32.totalorder %s382, 5
          %s384 = scalar_select %p383, %s382, 5
          %p385 = scmp.lt.s32.totalorder %s21, 0
          %s386 = scalar_select %p385, %s21, 0
          %s387 = sadd.s32 %s386, %s384
          %s388 = smul.addr %s387, 8
          %s389 = scalar_lea.vmem %s2, %s388
        $region44: #{color_jitter_pallas.1} parent=39 // pred_fallthru
          _
      $region40: #{color_jitter_pallas.1} parent=5 // pred_fallthru
        _
    $region6: #{color_jitter_pallas.1} parent=1 // loop_footer
      %s13 = sadd.s32 1, %s9
    $region7: #{color_jitter_pallas.1} parent=1 // loop_footer_branch
      %8 = sbr.rel target = $region3
    $region8: #{color_jitter_pallas.1} parent=1 // loop_exit
      _
    %390 = vsyncpa [#allocation3], 1
    %s391 = scalar_lea.sflag [#allocation3], 1
    %392 = vsyncpa %s391, 1

</llo_original>
